<compile_context>
chip_gen: v6e
topology: v6e:2x2x1
jax: 0.10.0
libtpu: 0.0.40
codegen_flags: <defaults>
</compile_context>

<pallas_src>
import jax
import jax.numpy as jnp
from jax.experimental import pallas as pl
from jax.experimental.pallas import tpu as pltpu

LANE = 128     # TPU lane width
SUBLANE = 8    # f32 sublane quantum


def mlp_kernel(x_ref, w1_ref, b1_ref, w2_ref, b2_ref, w3_ref, b3_ref, o_ref):
    # Fused fc1 -> relu -> fc2 -> relu -> fc3 -> relu on the current batch tile.
    # bf16 MXU operands, f32 accumulation; bias add + ReLU in f32.
    x = x_ref[...].astype(jnp.bfloat16)                    # no-op if x already bf16
    h1 = jnp.dot(x, w1_ref[...], preferred_element_type=jnp.float32) + b1_ref[...]
    h1 = jnp.maximum(h1, 0.0).astype(jnp.bfloat16)         # ReLU (dropout = identity, eval)
    h2 = jnp.dot(h1, w2_ref[...], preferred_element_type=jnp.float32) + b2_ref[...]
    h2 = jnp.maximum(h2, 0.0).astype(jnp.bfloat16)         # ReLU (dropout = identity, eval)
    h3 = jnp.dot(h2, w3_ref[...], preferred_element_type=jnp.float32) + b3_ref[...]
    o_ref[...] = jnp.maximum(h3, 0.0).astype(o_ref.dtype)  # bf16 lane-dense output block


def prepare_params(params):
    """One-time weight preprocessing (hoisted out of the per-call forward):
    bf16 MXU weights, W3/b3 zero-padded to a 128-lane output slab."""
    w1, b1, w2, b2, w3, b3 = params
    h2, out_dim = w3.shape
    out_pad = max(LANE, pl.cdiv(out_dim, LANE) * LANE)
    w3p = jnp.zeros((h2, out_pad), w3.dtype).at[:, :out_dim].set(w3)
    b3p = jnp.zeros((1, out_pad), b3.dtype).at[:, :out_dim].set(b3)
    return (
        w1.astype(jnp.bfloat16),
        b1.astype(jnp.float32),
        w2.astype(jnp.bfloat16),
        b2.astype(jnp.float32),
        w3p.astype(jnp.bfloat16),
        b3p.astype(jnp.float32),
        out_dim,
    )


def simple_model_forward(x, prepared, *, tile_b=1024):
    """x: any shape whose elements flatten to (-1, xy_size). Returns (B, out_dim) f32."""
    w1b, b1, w2b, b2, w3b, b3p, out_dim = prepared
    xy_size = w1b.shape[0]
    h1 = w1b.shape[1]
    h2 = w2b.shape[1]
    out_pad = w3b.shape[1]

    x2d = x.reshape(-1, xy_size)                           # glue: x.view(-1, xy_size)
    B = x2d.shape[0]

    # --- Batch tiling: multiple of 8 sublanes; cap so the grid has >=2      ---
    # --- "parallel" steps when B allows it (both TCs on v7x); no jnp.pad —  ---
    # --- Pallas handles the ragged last block.                              ---
    tile = min(tile_b, B)
    if B > SUBLANE:
        tile = min(tile, pl.cdiv(pl.cdiv(B, 2), SUBLANE) * SUBLANE)
    tile = max(SUBLANE, pl.cdiv(tile, SUBLANE) * SUBLANE)
    grid = (pl.cdiv(B, tile),)

    cost = pl.CostEstimate(
        flops=2 * B * (xy_size * h1 + h1 * h2 + h2 * out_pad),
        transcendentals=0,
        bytes_accessed=(B * xy_size * x2d.dtype.itemsize        # x (f32 or bf16 in HBM)
                        + (w1b.size + w2b.size + w3b.size) * 2  # bf16 weights
                        + (b1.size + b2.size + b3p.size) * 4    # f32 biases
                        + B * out_pad * 2),                     # bf16 output
    )

    out = pl.pallas_call(
        mlp_kernel,
        out_shape=jax.ShapeDtypeStruct((B, out_pad), jnp.bfloat16),
        grid_spec=pltpu.PrefetchScalarGridSpec(
            num_scalar_prefetch=0,
            grid=grid,
            in_specs=[
                pl.BlockSpec((tile, xy_size), lambda i: (i, 0)),   # x tile
                pl.BlockSpec((xy_size, h1), lambda i: (0, 0)),     # W1 (resident)
                pl.BlockSpec((1, h1), lambda i: (0, 0)),           # b1
                pl.BlockSpec((h1, h2), lambda i: (0, 0)),          # W2
                pl.BlockSpec((1, h2), lambda i: (0, 0)),           # b2
                pl.BlockSpec((h2, out_pad), lambda i: (0, 0)),     # W3 (lane-padded)
                pl.BlockSpec((1, out_pad), lambda i: (0, 0)),      # b3 (lane-padded)
            ],
            out_specs=pl.BlockSpec((tile, out_pad), lambda i: (i, 0)),
        ),
        compiler_params=pltpu.CompilerParams(
            dimension_semantics=("parallel",),                     # megacore on v7x
        ),
        cost_estimate=cost,
    )(x2d, w1b, b1, w2b, b2, w3b, b3p)

    # Slice away lane padding and return f32 (module semantics are f32).
    return out[:, :out_dim].astype(jnp.float32)


def init_params(key, xy_size, hidden_1=128, hidden_2=256, out_dim=4):
    """Deterministic synthetic parameters (shapes match the nn.Linear layers)."""
    k1, k2, k3, k4, k5, k6 = jax.random.split(key, 6)
    w1 = jax.random.normal(k1, (xy_size, hidden_1), jnp.float32) * 0.05
    b1 = jax.random.normal(k2, (1, hidden_1), jnp.float32) * 0.05
    w2 = jax.random.normal(k3, (hidden_1, hidden_2), jnp.float32) * 0.05
    b2 = jax.random.normal(k4, (1, hidden_2), jnp.float32) * 0.05
    w3 = jax.random.normal(k5, (hidden_2, out_dim), jnp.float32) * 0.05
    b3 = jax.random.normal(k6, (1, out_dim), jnp.float32) * 0.05
    return (w1, b1, w2, b2, w3, b3)


def reference_forward(x, params):
    """Pure-JAX f32 reference of the PyTorch forward (eval mode)."""
    w1, b1, w2, b2, w3, b3 = params
    x2d = x.reshape(-1, w1.shape[0])
    h = jnp.maximum(x2d @ w1 + b1, 0.0)
    h = jnp.maximum(h @ w2 + b2, 0.0)
    return jnp.maximum(h @ w3 + b3, 0.0)


if __name__ == "__main__":
    key = jax.random.PRNGKey(0)
    kx, kp, kx2 = jax.random.split(key, 3)

    # Small input consistent with x.view(-1, xy_size): (2,4,16,16) -> (8, 256)
    xy_size = 256
    x = jax.random.normal(kx, (2, 4, 16, 16), jnp.float32)
    params = init_params(kp, xy_size)
    prepared = prepare_params(params)          # one-time weight prep (hoisted)

    out = simple_model_forward(x, prepared)
    out = jax.block_until_ready(out)
    ref = reference_forward(x, params)
    assert out.shape == (8, 4), out.shape
    # bf16 MXU operands + bf16 output store (f32 accumulation) -> relaxed tolerance.
    assert jnp.allclose(out, ref, atol=5e-2, rtol=5e-2), "mismatch vs reference"

    # Second check: batch not a multiple of the tile -> exercises the ragged
    # last grid block (OOB input rows padded, OOB output rows masked).
    x2 = jax.random.normal(kx2, (3, 4, 16, 16), jnp.float32)   # B = 12
    out2 = jax.block_until_ready(simple_model_forward(x2, prepared))
    ref2 = reference_forward(x2, params)
    assert out2.shape == (12, 4), out2.shape
    assert jnp.allclose(out2, ref2, atol=5e-2, rtol=5e-2), "mismatch vs reference (ragged path)"

    print("KERNEL_OK")
</pallas_src>

<mosaic_0001>
module attributes {stable_mosaic.version = 11 : i64} {
  func.func @mlp_kernel(%arg0: i32, %arg1: memref<8x256xf32, #tpu.memory_space<vmem>>, %arg2: memref<256x128xbf16, #tpu.memory_space<vmem>>, %arg3: memref<1x128xf32, #tpu.memory_space<vmem>>, %arg4: memref<128x256xbf16, #tpu.memory_space<vmem>>, %arg5: memref<1x256xf32, #tpu.memory_space<vmem>>, %arg6: memref<256x128xbf16, #tpu.memory_space<vmem>>, %arg7: memref<1x128xf32, #tpu.memory_space<vmem>>, %arg8: memref<8x128xbf16, #tpu.memory_space<vmem>>) attributes {dimension_semantics = [#tpu.dimension_semantics<parallel>], iteration_bounds = array<i64: 1>, scalar_prefetch = 0 : i64, scratch_operands = 0 : i64, tpu.core_type = #tpu.core_type<tc>, window_params = [{transform_indices = @transform_0, window_bounds = array<i64: 8, 256>}, {pipeline_mode = #tpu.pipeline_mode<synchronous>, transform_indices = @transform_1, window_bounds = array<i64: 256, 128>}, {pipeline_mode = #tpu.pipeline_mode<synchronous>, transform_indices = @transform_2, window_bounds = array<i64: 1, 128>}, {pipeline_mode = #tpu.pipeline_mode<synchronous>, transform_indices = @transform_3, window_bounds = array<i64: 128, 256>}, {pipeline_mode = #tpu.pipeline_mode<synchronous>, transform_indices = @transform_4, window_bounds = array<i64: 1, 256>}, {pipeline_mode = #tpu.pipeline_mode<synchronous>, transform_indices = @transform_5, window_bounds = array<i64: 256, 128>}, {pipeline_mode = #tpu.pipeline_mode<synchronous>, transform_indices = @transform_6, window_bounds = array<i64: 1, 128>}, {transform_indices = @transform_7, window_bounds = array<i64: 8, 128>}]} {
    %c0 = arith.constant 0 : index
    %c0_0 = arith.constant 0 : index
    %0 = vector.load %arg1[%c0, %c0_0] : memref<8x256xf32, #tpu.memory_space<vmem>>, vector<8x256xf32>
    %1 = arith.truncf %0 : vector<8x256xf32> to vector<8x256xbf16>
    %c0_1 = arith.constant 0 : index
    %c0_2 = arith.constant 0 : index
    %2 = vector.load %arg2[%c0_1, %c0_2] : memref<256x128xbf16, #tpu.memory_space<vmem>>, vector<256x128xbf16>
    %cst = arith.constant dense<0.000000e+00> : vector<8x128xf32>
    %3 = tpu.matmul %1, %2, %cst {dimension_numbers = #tpu.dot_dimension_numbers<[1], [0], [0], [1], [0, 0, 1, 1], [], []>} : vector<8x256xbf16>, vector<256x128xbf16>, vector<8x128xf32> -> vector<8x128xf32>
    %c0_3 = arith.constant 0 : index
    %c0_4 = arith.constant 0 : index
    %4 = vector.load %arg3[%c0_3, %c0_4] : memref<1x128xf32, #tpu.memory_space<vmem>>, vector<1x128xf32>
    %5 = vector.broadcast %4 : vector<1x128xf32> to vector<8x128xf32>
    %6 = arith.addf %3, %5 : vector<8x128xf32>
    %cst_5 = arith.constant 0.000000e+00 : f32
    %7 = vector.broadcast %cst_5 : f32 to vector<8x128xf32>
    %8 = arith.maximumf %6, %7 : vector<8x128xf32>
    %9 = arith.truncf %8 : vector<8x128xf32> to vector<8x128xbf16>
    %c0_6 = arith.constant 0 : index
    %c0_7 = arith.constant 0 : index
    %10 = vector.load %arg4[%c0_6, %c0_7] : memref<128x256xbf16, #tpu.memory_space<vmem>>, vector<128x256xbf16>
    %cst_8 = arith.constant dense<0.000000e+00> : vector<8x256xf32>
    %11 = tpu.matmul %9, %10, %cst_8 {dimension_numbers = #tpu.dot_dimension_numbers<[1], [0], [0], [1], [0, 0, 1, 1], [], []>} : vector<8x128xbf16>, vector<128x256xbf16>, vector<8x256xf32> -> vector<8x256xf32>
    %c0_9 = arith.constant 0 : index
    %c0_10 = arith.constant 0 : index
    %12 = vector.load %arg5[%c0_9, %c0_10] : memref<1x256xf32, #tpu.memory_space<vmem>>, vector<1x256xf32>
    %13 = vector.broadcast %12 : vector<1x256xf32> to vector<8x256xf32>
    %14 = arith.addf %11, %13 : vector<8x256xf32>
    %cst_11 = arith.constant 0.000000e+00 : f32
    %15 = vector.broadcast %cst_11 : f32 to vector<8x256xf32>
    %16 = arith.maximumf %14, %15 : vector<8x256xf32>
    %17 = arith.truncf %16 : vector<8x256xf32> to vector<8x256xbf16>
    %c0_12 = arith.constant 0 : index
    %c0_13 = arith.constant 0 : index
    %18 = vector.load %arg6[%c0_12, %c0_13] : memref<256x128xbf16, #tpu.memory_space<vmem>>, vector<256x128xbf16>
    %cst_14 = arith.constant dense<0.000000e+00> : vector<8x128xf32>
    %19 = tpu.matmul %17, %18, %cst_14 {dimension_numbers = #tpu.dot_dimension_numbers<[1], [0], [0], [1], [0, 0, 1, 1], [], []>} : vector<8x256xbf16>, vector<256x128xbf16>, vector<8x128xf32> -> vector<8x128xf32>
    %c0_15 = arith.constant 0 : index
    %c0_16 = arith.constant 0 : index
    %20 = vector.load %arg7[%c0_15, %c0_16] : memref<1x128xf32, #tpu.memory_space<vmem>>, vector<1x128xf32>
    %21 = vector.broadcast %20 : vector<1x128xf32> to vector<8x128xf32>
    %22 = arith.addf %19, %21 : vector<8x128xf32>
    %cst_17 = arith.constant 0.000000e+00 : f32
    %23 = vector.broadcast %cst_17 : f32 to vector<8x128xf32>
    %24 = arith.maximumf %22, %23 : vector<8x128xf32>
    %25 = arith.truncf %24 : vector<8x128xf32> to vector<8x128xbf16>
    %c0_18 = arith.constant 0 : index
    %c0_19 = arith.constant 0 : index
    %26 = vector.load %arg8[%c0_18, %c0_19] : memref<8x128xbf16, #tpu.memory_space<vmem>>, vector<8x128xbf16>
    tpu.vector_store %arg8[%c0_18, %c0_19], %25 {strides = array<i32>} : memref<8x128xbf16, #tpu.memory_space<vmem>>, vector<8x128xbf16>,
    return
  }
  func.func @transform_0(%arg0: i32) -> (i32, i32) {
    %c0_i32 = arith.constant 0 : i32
    %c0_i32_0 = arith.constant 0 : i32
    return %arg0, %c0_i32 : i32, i32
  }
  func.func @transform_1(%arg0: i32) -> (i32, i32) {
    %c0_i32 = arith.constant 0 : i32
    %c0_i32_0 = arith.constant 0 : i32
    %c0_i32_1 = arith.constant 0 : i32
    return %c0_i32, %c0_i32_0 : i32, i32
  }
  func.func @transform_2(%arg0: i32) -> (i32, i32) {
    %c0_i32 = arith.constant 0 : i32
    %c0_i32_0 = arith.constant 0 : i32
    %c0_i32_1 = arith.constant 0 : i32
    return %c0_i32, %c0_i32_0 : i32, i32
  }
  func.func @transform_3(%arg0: i32) -> (i32, i32) {
    %c0_i32 = arith.constant 0 : i32
    %c0_i32_0 = arith.constant 0 : i32
    %c0_i32_1 = arith.constant 0 : i32
    return %c0_i32, %c0_i32_0 : i32, i32
  }
  func.func @transform_4(%arg0: i32) -> (i32, i32) {
    %c0_i32 = arith.constant 0 : i32
    %c0_i32_0 = arith.constant 0 : i32
    %c0_i32_1 = arith.constant 0 : i32
    return %c0_i32, %c0_i32_0 : i32, i32
  }
  func.func @transform_5(%arg0: i32) -> (i32, i32) {
    %c0_i32 = arith.constant 0 : i32
    %c0_i32_0 = arith.constant 0 : i32
    %c0_i32_1 = arith.constant 0 : i32
    return %c0_i32, %c0_i32_0 : i32, i32
  }
  func.func @transform_6(%arg0: i32) -> (i32, i32) {
    %c0_i32 = arith.constant 0 : i32
    %c0_i32_0 = arith.constant 0 : i32
    %c0_i32_1 = arith.constant 0 : i32
    return %c0_i32, %c0_i32_0 : i32, i32
  }
  func.func @transform_7(%arg0: i32) -> (i32, i32) {
    %c0_i32 = arith.constant 0 : i32
    %c0_i32_0 = arith.constant 0 : i32
    return %arg0, %c0_i32 : i32, i32
  }
}

</mosaic_0001>

<llo_original>
// kernel: tpu_custom_call.1
$region0: #{tpu_custom_call.1}
  #allocation0 [shape = 'u32[]', space=smem, size = 0x4, offset = 0x4, fixed_abs, tag = 'smem constant byte address 0x4 - core index']
  #allocation1 [shape = 'u32[144,128]{1,0:T(1,128)}', space=vmem, size = 0x12000, scoped, tag = 'internal scratch']
  %s0 = inlined_call_operand.hbm [shape: f32[8,256], index: 0, kind: input, shape index: {}]
  %s1 = inlined_call_operand.hbm [shape: bf16[256,128], index: 1, kind: input, shape index: {}]
  %s2 = inlined_call_operand.vmem [shape: f32[1,128], index: 2, kind: input, shape index: {}]
  %s3 = inlined_call_operand.hbm [shape: bf16[128,256], index: 3, kind: input, shape index: {}]
  %s4 = inlined_call_operand.vmem [shape: f32[1,256], index: 4, kind: input, shape index: {}]
  %s5 = inlined_call_operand.hbm [shape: bf16[256,128], index: 5, kind: input, shape index: {}]
  %s6 = inlined_call_operand.vmem [shape: f32[1,128], index: 6, kind: input, shape index: {}]
  %s7 = inlined_call_operand.hbm [shape: bf16[8,128], index: 7, kind: output, shape index: {}]
  %s8 = sld [smem:[#allocation0]]
  $region54: #{tpu_custom_call.1} parent=0
    _
  %s10 = ssub.s32 1, %s8
  %s11 = scalar_select 0, %s10, %s8
  $region1: #{tpu_custom_call.1} parent=0
    #allocation2 [shape = 'u8[8192]{0}', space=vmem, size = 0x2000, scoped, tag = 'input window, operand 0, single buffered']
    #allocation3 [shape = 's32[1]{0}', space=sflag, size = 0x4, scoped, tag = 'scoped memory for tpu_custom_call.1']
    #allocation4 [shape = 's32[1]{0}', space=sflag, size = 0x4, scoped, tag = 'scoped memory for tpu_custom_call.1']
    #allocation5 [shape = 'u8[65536]{0}', space=vmem, size = 0x10000, scoped, tag = 'input window, operand 1, single buffered']
    #allocation6 [shape = 's32[1]{0}', space=sflag, size = 0x4, scoped, tag = 'scoped memory for tpu_custom_call.1']
    #allocation7 [shape = 'u8[65536]{0}', space=vmem, size = 0x10000, scoped, tag = 'input window, operand 3, single buffered']
    #allocation8 [shape = 'u8[65536]{0}', space=vmem, size = 0x10000, scoped, tag = 'input window, operand 5, single buffered']
    #allocation9 [shape = 's32[1]{0}', space=sflag, size = 0x4, scoped, tag = 'scoped memory for tpu_custom_call.1']
    #allocation10 [shape = 'u8[2048]{0}', space=vmem, size = 0x800, scoped, tag = 'output window, operand 0, single buffered']
    %12 = vsyncpa [#allocation3], 0
    %13 = vsyncpa [#allocation6], 0
    %14 = vsyncpa [#allocation9], 0
    %15 = vsyncpa [#allocation4], 0
    // Predicated region
    $region2: #{tpu_custom_call.1} parent=1 // pred_check
      _
    $region3: #{tpu_custom_call.1} parent=1 // pred_check_branch
      %17 = sbr.rel (0) target = $region5
    $region4: #{tpu_custom_call.1} parent=1 // pred_region
      %s19 = ssub.s32 256, 256
      %20 = vsyncadd [#allocation3], %s19
      %s22 = sshll.u32 [#allocation2], 4
      %s23 = int_to_ptr.vmem [resolvable:$true] %s22
      %25 = dma.hbm_to_vmem [thread:$0]  %s0, 256, %s23, [#allocation3]
    $region5: #{tpu_custom_call.1} parent=1 // pred_fallthru
      _
    // Predicated region
    $region6: #{tpu_custom_call.1} parent=1 // pred_check
      _
    $region7: #{tpu_custom_call.1} parent=1 // pred_check_branch
      %27 = sbr.rel (0) target = $region9
    $region8: #{tpu_custom_call.1} parent=1 // pred_region
      %s29 = ssub.s32 2048, 2048
      %30 = vsyncadd [#allocation6], %s29
      %s31 = sshll.u32 [#allocation5], 4
      %s32 = int_to_ptr.vmem [resolvable:$true] %s31
      %37 = dma.hbm_to_vmem [thread:$0]  %s1, 2048, %s32, [#allocation6], 64, 64, 4
    $region9: #{tpu_custom_call.1} parent=1 // pred_fallthru
      _
    // Predicated region
    $region10: #{tpu_custom_call.1} parent=1 // pred_check
      _
    $region11: #{tpu_custom_call.1} parent=1 // pred_check_branch
      %39 = sbr.rel (0) target = $region13
    $region12: #{tpu_custom_call.1} parent=1 // pred_region
      _
    $region13: #{tpu_custom_call.1} parent=1 // pred_fallthru
      _
    // Predicated region
    $region14: #{tpu_custom_call.1} parent=1 // pred_check
      _
    $region15: #{tpu_custom_call.1} parent=1 // pred_check_branch
      %41 = sbr.rel (0) target = $region17
    $region16: #{tpu_custom_call.1} parent=1 // pred_region
      %s43 = ssub.s32 2048, 2048
      %44 = vsyncadd [#allocation6], %s43
      %s45 = sshll.u32 [#allocation7], 4
      %s46 = int_to_ptr.vmem [resolvable:$true] %s45
      %51 = dma.hbm_to_vmem [thread:$0]  %s3, 2048, %s46, [#allocation6], 128, 128, 8
    $region17: #{tpu_custom_call.1} parent=1 // pred_fallthru
      _
    // Predicated region
    $region18: #{tpu_custom_call.1} parent=1 // pred_check
      _
    $region19: #{tpu_custom_call.1} parent=1 // pred_check_branch
      %53 = sbr.rel (0) target = $region21
    $region20: #{tpu_custom_call.1} parent=1 // pred_region
      _
    $region21: #{tpu_custom_call.1} parent=1 // pred_fallthru
      _
    // Predicated region
    $region22: #{tpu_custom_call.1} parent=1 // pred_check
      _
    $region23: #{tpu_custom_call.1} parent=1 // pred_check_branch
      %55 = sbr.rel (0) target = $region25
    $region24: #{tpu_custom_call.1} parent=1 // pred_region
      %s57 = ssub.s32 2048, 2048
      %58 = vsyncadd [#allocation9], %s57
      %s59 = sshll.u32 [#allocation8], 4
      %s60 = int_to_ptr.vmem [resolvable:$true] %s59
      %65 = dma.hbm_to_vmem [thread:$0]  %s5, 2048, %s60, [#allocation9], 64, 64, 4
    $region25: #{tpu_custom_call.1} parent=1 // pred_fallthru
      _
    // Predicated region
    $region26: #{tpu_custom_call.1} parent=1 // pred_check
      _
    $region27: #{tpu_custom_call.1} parent=1 // pred_check_branch
      %67 = sbr.rel (0) target = $region29
    $region28: #{tpu_custom_call.1} parent=1 // pred_region
      _
    $region29: #{tpu_custom_call.1} parent=1 // pred_fallthru
      _
    // Predicated region
    $region30: #{tpu_custom_call.1} parent=1 // pred_check
      _
    $region31: #{tpu_custom_call.1} parent=1 // pred_check_branch
      %69 = sbr.rel (0) target = $region33
    $region32: #{tpu_custom_call.1} parent=1 // pred_region
      %70 = dma.done [#allocation3], 256
    $region33: #{tpu_custom_call.1} parent=1 // pred_fallthru
      _
    // Predicated region
    $region34: #{tpu_custom_call.1} parent=1 // pred_check
      _
    $region35: #{tpu_custom_call.1} parent=1 // pred_check_branch
      %72 = sbr.rel (0) target = $region37
    $region36: #{tpu_custom_call.1} parent=1 // pred_region
      %73 = dma.done [#allocation6], 2048
    $region37: #{tpu_custom_call.1} parent=1 // pred_fallthru
      _
    // Predicated region
    $region38: #{tpu_custom_call.1} parent=1 // pred_check
      _
    $region39: #{tpu_custom_call.1} parent=1 // pred_check_branch
      %75 = sbr.rel (0) target = $region41
    $region40: #{tpu_custom_call.1} parent=1 // pred_region
      %76 = dma.done [#allocation6], 2048
    $region41: #{tpu_custom_call.1} parent=1 // pred_fallthru
      _
    // Predicated region
    $region42: #{tpu_custom_call.1} parent=1 // pred_check
      _
    $region43: #{tpu_custom_call.1} parent=1 // pred_check_branch
      %78 = sbr.rel (0) target = $region45
    $region44: #{tpu_custom_call.1} parent=1 // pred_region
      %79 = dma.done [#allocation9], 2048
    $region45: #{tpu_custom_call.1} parent=1 // pred_fallthru
      _
    %v81 = vld [vmem:[#allocation2] sm:$0xff]
    %v82 = vld [vmem:[#allocation2 + $0x8] sm:$0xff]
    %v83 = vpack.c.bf16 %v81, %v81
    %v84 = vpack.c.bf16 %v82, %v82
    %v85 = vld [vmem:[#allocation5] sm:$0xf]
    %v86 = vld [vmem:[#allocation5 + $0x4] sm:$0xf]
    %v87 = vld [vmem:[#allocation5 + $0x8] sm:$0xf]
    %v88 = vld [vmem:[#allocation5 + $0xc] sm:$0xf]
    %v89 = vld [vmem:[#allocation5 + $0x10] sm:$0xf]
    %v90 = vld [vmem:[#allocation5 + $0x14] sm:$0xf]
    %v91 = vld [vmem:[#allocation5 + $0x18] sm:$0xf]
    %v92 = vld [vmem:[#allocation5 + $0x1c] sm:$0xf]
    %v93 = vld [vmem:[#allocation5 + $0x20] sm:$0xf]
    %v94 = vld [vmem:[#allocation5 + $0x24] sm:$0xf]
    %v95 = vld [vmem:[#allocation5 + $0x28] sm:$0xf]
    %v96 = vld [vmem:[#allocation5 + $0x2c] sm:$0xf]
    %v97 = vld [vmem:[#allocation5 + $0x30] sm:$0xf]
    %v98 = vld [vmem:[#allocation5 + $0x34] sm:$0xf]
    %v99 = vld [vmem:[#allocation5 + $0x38] sm:$0xf]
    %v100 = vld [vmem:[#allocation5 + $0x3c] sm:$0xf]
    %v101 = vld [vmem:[#allocation5 + $0x40] sm:$0xf]
    %v102 = vld [vmem:[#allocation5 + $0x44] sm:$0xf]
    %v103 = vld [vmem:[#allocation5 + $0x48] sm:$0xf]
    %v104 = vld [vmem:[#allocation5 + $0x4c] sm:$0xf]
    %v105 = vld [vmem:[#allocation5 + $0x50] sm:$0xf]
    %v106 = vld [vmem:[#allocation5 + $0x54] sm:$0xf]
    %v107 = vld [vmem:[#allocation5 + $0x58] sm:$0xf]
    %v108 = vld [vmem:[#allocation5 + $0x5c] sm:$0xf]
    %v109 = vld [vmem:[#allocation5 + $0x60] sm:$0xf]
    %v110 = vld [vmem:[#allocation5 + $0x64] sm:$0xf]
    %v111 = vld [vmem:[#allocation5 + $0x68] sm:$0xf]
    %v112 = vld [vmem:[#allocation5 + $0x6c] sm:$0xf]
    %v113 = vld [vmem:[#allocation5 + $0x70] sm:$0xf]
    %v114 = vld [vmem:[#allocation5 + $0x74] sm:$0xf]
    %v115 = vld [vmem:[#allocation5 + $0x78] sm:$0xf]
    %v116 = vld [vmem:[#allocation5 + $0x7c] sm:$0xf]
    %v117 = vld [vmem:[%s2] sm:$0x1]
    %v119 = vlaneseq
    %v120 = vshrl.u32 %v119, 7
    %v121 = vsub.s32 0, %v120
    %v122 = vrot.slane %v117, %v121
    %v156 = vunpack.c.l.b16 %v85
    %v157 = vunpack.c.l.b16 %v86
    %v158 = vunpack.c.l.b16 %v87
    %v159 = vunpack.c.l.b16 %v88
    %v160 = vunpack.c.l.b16 %v89
    %v161 = vunpack.c.l.b16 %v90
    %v162 = vunpack.c.l.b16 %v91
    %v163 = vunpack.c.l.b16 %v92
    %v164 = vunpack.c.l.b16 %v93
    %v165 = vunpack.c.l.b16 %v94
    %v166 = vunpack.c.l.b16 %v95
    %v167 = vunpack.c.l.b16 %v96
    %v168 = vunpack.c.l.b16 %v97
    %v169 = vunpack.c.l.b16 %v98
    %v170 = vunpack.c.l.b16 %v99
    %v171 = vunpack.c.l.b16 %v100
    %v172 = vunpack.c.l.b16 %v101
    %v173 = vunpack.c.l.b16 %v102
    %v174 = vunpack.c.l.b16 %v103
    %v175 = vunpack.c.l.b16 %v104
    %v176 = vunpack.c.l.b16 %v105
    %v177 = vunpack.c.l.b16 %v106
    %v178 = vunpack.c.l.b16 %v107
    %v179 = vunpack.c.l.b16 %v108
    %v180 = vunpack.c.l.b16 %v109
    %v181 = vunpack.c.l.b16 %v110
    %v182 = vunpack.c.l.b16 %v111
    %v183 = vunpack.c.l.b16 %v112
    %v184 = vunpack.c.l.b16 %v113
    %v185 = vunpack.c.l.b16 %v114
    %v186 = vunpack.c.l.b16 %v115
    %v187 = vunpack.c.l.b16 %v116
    %v188 = vpack.c.b16 %v157, %v156
    %v189 = vpack.c.b16 %v159, %v158
    %v190 = vpack.c.b16 %v161, %v160
    %v191 = vpack.c.b16 %v163, %v162
    %v192 = vpack.c.b16 %v165, %v164
    %v193 = vpack.c.b16 %v167, %v166
    %v194 = vpack.c.b16 %v169, %v168
    %v195 = vpack.c.b16 %v171, %v170
    %v196 = vpack.c.b16 %v173, %v172
    %v197 = vpack.c.b16 %v175, %v174
    %v198 = vpack.c.b16 %v177, %v176
    %v199 = vpack.c.b16 %v179, %v178
    %v200 = vpack.c.b16 %v181, %v180
    %v201 = vpack.c.b16 %v183, %v182
    %v202 = vpack.c.b16 %v185, %v184
    %v203 = vpack.c.b16 %v187, %v186
    %220 = vmatprep.subr.bf16.mxu0 0
    %221 = vmatpush1.bf16.msra.mxu0 %v195
    %222 = vmatprep.subr.bf16.mxu0 0
    %223 = vmatpush1.bf16.msra.mxu0 %v194
    %224 = vmatprep.subr.bf16.mxu0 0
    %225 = vmatpush1.bf16.msra.mxu0 %v193
    %226 = vmatprep.subr.bf16.mxu0 0
    %227 = vmatpush1.bf16.msra.mxu0 %v192
    %228 = vmatprep.subr.bf16.mxu0 0
    %229 = vmatpush1.bf16.msra.mxu0 %v191
    %230 = vmatprep.subr.bf16.mxu0 0
    %231 = vmatpush1.bf16.msra.mxu0 %v190
    %232 = vmatprep.subr.bf16.mxu0 0
    %233 = vmatpush1.bf16.msra.mxu0 %v189
    %234 = vmatprep.subr.bf16.mxu0 0
    %235 = vmatpush1.bf16.msra.mxu0 %v188
    %236 = vmatprep.subr.bf16.mxu0 0
    %237 = vmatpush2.bf16.msra.mxu0 %v203
    %238 = vmatprep.subr.bf16.mxu0 0
    %239 = vmatpush2.bf16.msra.mxu0 %v202
    %240 = vmatprep.subr.bf16.mxu0 0
    %241 = vmatpush2.bf16.msra.mxu0 %v201
    %242 = vmatprep.subr.bf16.mxu0 0
    %243 = vmatpush2.bf16.msra.mxu0 %v200
    %244 = vmatprep.subr.bf16.mxu0 0
    %245 = vmatpush2.bf16.msra.mxu0 %v199
    %246 = vmatprep.subr.bf16.mxu0 0
    %247 = vmatpush2.bf16.msra.mxu0 %v198
    %248 = vmatprep.subr.bf16.mxu0 0
    %249 = vmatpush2.bf16.msra.mxu0 %v197
    %250 = vmatprep.subr.bf16.mxu0 0
    %251 = vmatpush2.bf16.msra.mxu0 %v196
    %252 = vmatprep.mubr.bf16.mxu0 %v84
    %253 = vmatmul.mubr.bf16.gmra.mxu0 %v83
    %v254 = vpop.f32.mrf.mxu0
    %v255 = vadd.f32 %v122, %v254
    %v256 = vpop.f32.mrf.mxu0
    %v257 = vpop.f32.mrf.mxu0
    %v258 = vpop.f32.mrf.mxu0
    %259 = vdwg.mxu0
    %v260 = vmax.f32 %v255, 0.0
    %v261 = vpack.c.bf16 %v260, %v260
    %v262 = vld [vmem:[#allocation7] sm:$0xff]
    %v263 = vld [vmem:[#allocation7 + $0x8] sm:$0xff]
    %v264 = vld [vmem:[#allocation7 + $0x10] sm:$0xff]
    %v265 = vld [vmem:[#allocation7 + $0x18] sm:$0xff]
    %v266 = vld [vmem:[#allocation7 + $0x20] sm:$0xff]
    %v267 = vld [vmem:[#allocation7 + $0x28] sm:$0xff]
    %v268 = vld [vmem:[#allocation7 + $0x30] sm:$0xff]
    %v269 = vld [vmem:[#allocation7 + $0x38] sm:$0xff]
    %v270 = vld [vmem:[#allocation7 + $0x40] sm:$0xff]
    %v271 = vld [vmem:[#allocation7 + $0x48] sm:$0xff]
    %v272 = vld [vmem:[#allocation7 + $0x50] sm:$0xff]
    %v273 = vld [vmem:[#allocation7 + $0x58] sm:$0xff]
    %v274 = vld [vmem:[#allocation7 + $0x60] sm:$0xff]
    %v275 = vld [vmem:[#allocation7 + $0x68] sm:$0xff]
    %v276 = vld [vmem:[#allocation7 + $0x70] sm:$0xff]
    %v277 = vld [vmem:[#allocation7 + $0x78] sm:$0xff]
    %v278 = vld [vmem:[%s4] sm:$0x3]
    %v280 = vlaneseq
    %v281 = vshrl.u32 %v280, 7
    %v282 = vsub.s32 0, %v281
    %v283 = vrot.slane %v278, %v282
    %v284 = vlaneseq
    %v285 = vshrl.u32 %v284, 7
    %v286 = vsub.s32 1, %v285
    %v287 = vrot.slane %v278, %v286
    %v306 = vunpack.c.l.b16 %v262
    %v307 = vunpack.c.h.b16 %v262
    %v308 = vunpack.c.l.b16 %v263
    %v309 = vunpack.c.h.b16 %v263
    %v310 = vunpack.c.l.b16 %v264
    %v311 = vunpack.c.h.b16 %v264
    %v312 = vunpack.c.l.b16 %v265
    %v313 = vunpack.c.h.b16 %v265
    %v314 = vunpack.c.l.b16 %v266
    %v315 = vunpack.c.h.b16 %v266
    %v316 = vunpack.c.l.b16 %v267
    %v317 = vunpack.c.h.b16 %v267
    %v318 = vunpack.c.l.b16 %v268
    %v319 = vunpack.c.h.b16 %v268
    %v320 = vunpack.c.l.b16 %v269
    %v321 = vunpack.c.h.b16 %v269
    %v322 = vunpack.c.l.b16 %v270
    %v323 = vunpack.c.h.b16 %v270
    %v324 = vunpack.c.l.b16 %v271
    %v325 = vunpack.c.h.b16 %v271
    %v326 = vunpack.c.l.b16 %v272
    %v327 = vunpack.c.h.b16 %v272
    %v328 = vunpack.c.l.b16 %v273
    %v329 = vunpack.c.h.b16 %v273
    %v330 = vunpack.c.l.b16 %v274
    %v331 = vunpack.c.h.b16 %v274
    %v332 = vunpack.c.l.b16 %v275
    %v333 = vunpack.c.h.b16 %v275
    %v334 = vunpack.c.l.b16 %v276
    %v335 = vunpack.c.h.b16 %v276
    %v336 = vunpack.c.l.b16 %v277
    %v337 = vunpack.c.h.b16 %v277
    %v338 = vpack.c.b16 %v308, %v306
    %v339 = vpack.c.b16 %v309, %v307
    %v340 = vpack.c.b16 %v312, %v310
    %v341 = vpack.c.b16 %v313, %v311
    %v342 = vpack.c.b16 %v316, %v314
    %v343 = vpack.c.b16 %v317, %v315
    %v344 = vpack.c.b16 %v320, %v318
    %v345 = vpack.c.b16 %v321, %v319
    %v346 = vpack.c.b16 %v324, %v322
    %v347 = vpack.c.b16 %v325, %v323
    %v348 = vpack.c.b16 %v328, %v326
    %v349 = vpack.c.b16 %v329, %v327
    %v350 = vpack.c.b16 %v332, %v330
    %v351 = vpack.c.b16 %v333, %v331
    %v352 = vpack.c.b16 %v336, %v334
    %v353 = vpack.c.b16 %v337, %v335
    %370 = vmatprep.subr.bf16.mxu0 %v353
    %371 = vmatpush1.bf16.msra.mxu0 %v352
    %372 = vmatprep.subr.bf16.mxu0 %v351
    %373 = vmatpush1.bf16.msra.mxu0 %v350
    %374 = vmatprep.subr.bf16.mxu0 %v349
    %375 = vmatpush1.bf16.msra.mxu0 %v348
    %376 = vmatprep.subr.bf16.mxu0 %v347
    %377 = vmatpush1.bf16.msra.mxu0 %v346
    %378 = vmatprep.subr.bf16.mxu0 %v345
    %379 = vmatpush1.bf16.msra.mxu0 %v344
    %380 = vmatprep.subr.bf16.mxu0 %v343
    %381 = vmatpush1.bf16.msra.mxu0 %v342
    %382 = vmatprep.subr.bf16.mxu0 %v341
    %383 = vmatpush1.bf16.msra.mxu0 %v340
    %384 = vmatprep.subr.bf16.mxu0 %v339
    %385 = vmatpush1.bf16.msra.mxu0 %v338
    %386 = vmatprep.subr.bf16.mxu0 0
    %387 = vmatpush2.bf16.msra.mxu0 0
    %388 = vmatprep.subr.bf16.mxu0 0
    %389 = vmatpush2.bf16.msra.mxu0 0
    %390 = vmatprep.subr.bf16.mxu0 0
    %391 = vmatpush2.bf16.msra.mxu0 0
    %392 = vmatprep.subr.bf16.mxu0 0
    %393 = vmatpush2.bf16.msra.mxu0 0
    %394 = vmatprep.subr.bf16.mxu0 0
    %395 = vmatpush2.bf16.msra.mxu0 0
    %396 = vmatprep.subr.bf16.mxu0 0
    %397 = vmatpush2.bf16.msra.mxu0 0
    %398 = vmatprep.subr.bf16.mxu0 0
    %399 = vmatpush2.bf16.msra.mxu0 0
    %400 = vmatprep.subr.bf16.mxu0 0
    %401 = vmatpush2.bf16.msra.mxu0 0
    %402 = vmatprep.mubr.bf16.mxu0 0
    %403 = vmatmul.mubr.bf16.gmra.mxu0 %v261
    %v404 = vpop.f32.mrf.mxu0
    %v405 = vadd.f32 %v283, %v404
    %v406 = vpop.f32.mrf.mxu0
    %v407 = vadd.f32 %v287, %v406
    %v408 = vpop.f32.mrf.mxu0
    %v409 = vpop.f32.mrf.mxu0
    %410 = vdwg.mxu0
    %v411 = vmax.f32 %v405, 0.0
    %v412 = vmax.f32 %v407, 0.0
    %v413 = vpack.c.bf16 %v411, %v411
    %v414 = vpack.c.bf16 %v412, %v412
    %v415 = vld [vmem:[#allocation8] sm:$0xf]
    %v416 = vld [vmem:[#allocation8 + $0x4] sm:$0xf]
    %v417 = vld [vmem:[#allocation8 + $0x8] sm:$0xf]
    %v418 = vld [vmem:[#allocation8 + $0xc] sm:$0xf]
    %v419 = vld [vmem:[#allocation8 + $0x10] sm:$0xf]
    %v420 = vld [vmem:[#allocation8 + $0x14] sm:$0xf]
    %v421 = vld [vmem:[#allocation8 + $0x18] sm:$0xf]
    %v422 = vld [vmem:[#allocation8 + $0x1c] sm:$0xf]
    %v423 = vld [vmem:[#allocation8 + $0x20] sm:$0xf]
    %v424 = vld [vmem:[#allocation8 + $0x24] sm:$0xf]
    %v425 = vld [vmem:[#allocation8 + $0x28] sm:$0xf]
    %v426 = vld [vmem:[#allocation8 + $0x2c] sm:$0xf]
    %v427 = vld [vmem:[#allocation8 + $0x30] sm:$0xf]
    %v428 = vld [vmem:[#allocation8 + $0x34] sm:$0xf]
    %v429 = vld [vmem:[#allocation8 + $0x38] sm:$0xf]
    %v430 = vld [vmem:[#allocation8 + $0x3c] sm:$0xf]
    %v431 = vld [vmem:[#allocation8 + $0x40] sm:$0xf]
    %v432 = vld [vmem:[#allocation8 + $0x44] sm:$0xf]
    %v433 = vld [vmem:[#allocation8 + $0x48] sm:$0xf]
    %v434 = vld [vmem:[#allocation8 + $0x4c] sm:$0xf]
    %v435 = vld [vmem:[#allocation8 + $0x50] sm:$0xf]
    %v436 = vld [vmem:[#allocation8 + $0x54] sm:$0xf]
    %v437 = vld [vmem:[#allocation8 + $0x58] sm:$0xf]
    %v438 = vld [vmem:[#allocation8 + $0x5c] sm:$0xf]
    %v439 = vld [vmem:[#allocation8 + $0x60] sm:$0xf]
    %v440 = vld [vmem:[#allocation8 + $0x64] sm:$0xf]
    %v441 = vld [vmem:[#allocation8 + $0x68] sm:$0xf]
    %v442 = vld [vmem:[#allocation8 + $0x6c] sm:$0xf]
    %v443 = vld [vmem:[#allocation8 + $0x70] sm:$0xf]
    %v444 = vld [vmem:[#allocation8 + $0x74] sm:$0xf]
    %v445 = vld [vmem:[#allocation8 + $0x78] sm:$0xf]
    %v446 = vld [vmem:[#allocation8 + $0x7c] sm:$0xf]
    %v447 = vld [vmem:[%s6] sm:$0x1]
    %v449 = vlaneseq
    %v450 = vshrl.u32 %v449, 7
    %v451 = vsub.s32 0, %v450
    %v452 = vrot.slane %v447, %v451
    %v486 = vunpack.c.l.b16 %v415
    %v487 = vunpack.c.l.b16 %v416
    %v488 = vunpack.c.l.b16 %v417
    %v489 = vunpack.c.l.b16 %v418
    %v490 = vunpack.c.l.b16 %v419
    %v491 = vunpack.c.l.b16 %v420
    %v492 = vunpack.c.l.b16 %v421
    %v493 = vunpack.c.l.b16 %v422
    %v494 = vunpack.c.l.b16 %v423
    %v495 = vunpack.c.l.b16 %v424
    %v496 = vunpack.c.l.b16 %v425
    %v497 = vunpack.c.l.b16 %v426
    %v498 = vunpack.c.l.b16 %v427
    %v499 = vunpack.c.l.b16 %v428
    %v500 = vunpack.c.l.b16 %v429
    %v501 = vunpack.c.l.b16 %v430
    %v502 = vunpack.c.l.b16 %v431
    %v503 = vunpack.c.l.b16 %v432
    %v504 = vunpack.c.l.b16 %v433
    %v505 = vunpack.c.l.b16 %v434
    %v506 = vunpack.c.l.b16 %v435
    %v507 = vunpack.c.l.b16 %v436
    %v508 = vunpack.c.l.b16 %v437
    %v509 = vunpack.c.l.b16 %v438
    %v510 = vunpack.c.l.b16 %v439
    %v511 = vunpack.c.l.b16 %v440
    %v512 = vunpack.c.l.b16 %v441
    %v513 = vunpack.c.l.b16 %v442
    %v514 = vunpack.c.l.b16 %v443
    %v515 = vunpack.c.l.b16 %v444
    %v516 = vunpack.c.l.b16 %v445
    %v517 = vunpack.c.l.b16 %v446
    %v518 = vpack.c.b16 %v487, %v486
    %v519 = vpack.c.b16 %v489, %v488
    %v520 = vpack.c.b16 %v491, %v490
    %v521 = vpack.c.b16 %v493, %v492
    %v522 = vpack.c.b16 %v495, %v494
    %v523 = vpack.c.b16 %v497, %v496
    %v524 = vpack.c.b16 %v499, %v498
    %v525 = vpack.c.b16 %v501, %v500
    %v526 = vpack.c.b16 %v503, %v502
    %v527 = vpack.c.b16 %v505, %v504
    %v528 = vpack.c.b16 %v507, %v506
    %v529 = vpack.c.b16 %v509, %v508
    %v530 = vpack.c.b16 %v511, %v510
    %v531 = vpack.c.b16 %v513, %v512
    %v532 = vpack.c.b16 %v515, %v514
    %v533 = vpack.c.b16 %v517, %v516
    %550 = vmatprep.subr.bf16.mxu0 0
    %551 = vmatpush1.bf16.msra.mxu0 %v525
    %552 = vmatprep.subr.bf16.mxu0 0
    %553 = vmatpush1.bf16.msra.mxu0 %v524
    %554 = vmatprep.subr.bf16.mxu0 0
    %555 = vmatpush1.bf16.msra.mxu0 %v523
    %556 = vmatprep.subr.bf16.mxu0 0
    %557 = vmatpush1.bf16.msra.mxu0 %v522
    %558 = vmatprep.subr.bf16.mxu0 0
    %559 = vmatpush1.bf16.msra.mxu0 %v521
    %560 = vmatprep.subr.bf16.mxu0 0
    %561 = vmatpush1.bf16.msra.mxu0 %v520
    %562 = vmatprep.subr.bf16.mxu0 0
    %563 = vmatpush1.bf16.msra.mxu0 %v519
    %564 = vmatprep.subr.bf16.mxu0 0
    %565 = vmatpush1.bf16.msra.mxu0 %v518
    %566 = vmatprep.subr.bf16.mxu0 0
    %567 = vmatpush2.bf16.msra.mxu0 %v533
    %568 = vmatprep.subr.bf16.mxu0 0
    %569 = vmatpush2.bf16.msra.mxu0 %v532
    %570 = vmatprep.subr.bf16.mxu0 0
    %571 = vmatpush2.bf16.msra.mxu0 %v531
    %572 = vmatprep.subr.bf16.mxu0 0
    %573 = vmatpush2.bf16.msra.mxu0 %v530
    %574 = vmatprep.subr.bf16.mxu0 0
    %575 = vmatpush2.bf16.msra.mxu0 %v529
    %576 = vmatprep.subr.bf16.mxu0 0
    %577 = vmatpush2.bf16.msra.mxu0 %v528
    %578 = vmatprep.subr.bf16.mxu0 0
    %579 = vmatpush2.bf16.msra.mxu0 %v527
    %580 = vmatprep.subr.bf16.mxu0 0
    %581 = vmatpush2.bf16.msra.mxu0 %v526
    %582 = vmatprep.mubr.bf16.mxu0 %v414
    %583 = vmatmul.mubr.bf16.gmra.mxu0 %v413
    %v584 = vpop.f32.mrf.mxu0
    %v585 = vadd.f32 %v452, %v584
    %v586 = vpop.f32.mrf.mxu0
    %v587 = vpop.f32.mrf.mxu0
    %v588 = vpop.f32.mrf.mxu0
    %589 = vdwg.mxu0
    %v590 = vmax.f32 %v585, 0.0
    %v591 = vpack.c.bf16 %v590, %v590
    %592 = vst [vmem:[#allocation10] sm:$0xf] %v591
    // Predicated region
    $region46: #{tpu_custom_call.1} parent=1 // pred_check
      _
    $region47: #{tpu_custom_call.1} parent=1 // pred_check_branch
      %594 = sbr.rel (0) target = $region49
    $region48: #{tpu_custom_call.1} parent=1 // pred_region
      %s596 = ssub.s32 64, 64
      %597 = vsyncadd [#allocation4], %s596
      %s599 = sshll.u32 [#allocation10], 4
      %s600 = int_to_ptr.vmem [resolvable:$true] %s599
      %602 = dma.vmem_to_hbm [thread:$0]  %s600, 64, %s7, [#allocation4]
    $region49: #{tpu_custom_call.1} parent=1 // pred_fallthru
      _
    // Predicated region
    $region50: #{tpu_custom_call.1} parent=1 // pred_check
      _
    $region51: #{tpu_custom_call.1} parent=1 // pred_check_branch
      %604 = sbr.rel (0) target = $region53
    $region52: #{tpu_custom_call.1} parent=1 // pred_region
      %605 = dma.done [#allocation4], 64
    $region53: #{tpu_custom_call.1} parent=1 // pred_fallthru
      _
    %606 = vsyncpa [#allocation3], 1
    %607 = vsyncpa [#allocation6], 1
    %608 = vsyncpa [#allocation9], 1
    %609 = vsyncpa [#allocation4], 1

</llo_original>
